<compile_context>
chip_gen: v7x
topology: tpu7x:2x2x1
jax: 0.10.0
libtpu: 0.0.40
codegen_flags: <defaults>
</compile_context>

<pallas_src>
import functools

import jax
import jax.numpy as jnp
from jax.experimental import pallas as pl
from jax.experimental.pallas import tpu as pltpu


def _round_up(x, m):
    return (x + m - 1) // m * m


def _self_output_kernel(x_ref, w_ref, b_ref, res_ref, g_ref, beta_ref, o_ref, *, eps):
    # x_ref:(tm,H)  w_ref:(H,H)  b/g/beta:(1,H)  res_ref:(tm,H)  o_ref:(tm,H)
    # One MXU call per row tile (full K), f32 accumulation.
    y = jnp.dot(x_ref[...], w_ref[...], preferred_element_type=jnp.float32)
    y = y + b_ref[...].astype(jnp.float32) + res_ref[...].astype(jnp.float32)
    # TODO(synk): training-mode dropout (pltpu.prng_*) not implemented; eval dropout is identity.
    mean = jnp.mean(y, axis=-1, keepdims=True)
    ctr = y - mean
    var = jnp.mean(ctr * ctr, axis=-1, keepdims=True)
    inv = jax.lax.rsqrt(var + eps)
    out = ctr * inv * g_ref[...].astype(jnp.float32) + beta_ref[...].astype(jnp.float32)
    o_ref[...] = out.astype(o_ref.dtype)


def roberta_self_output(hidden_states, input_tensor, weight_t, bias, gamma, beta,
                        *, eps=1e-12, tm=256):
    """hidden_states/input_tensor: [B,S,H]; weight_t: [H,H] (so kernel does x @ weight_t);
    bias/gamma/beta: [H]. Returns [B,S,H]."""
    B, S, H = hidden_states.shape
    assert input_tensor.shape == (B, S, H)
    assert weight_t.shape == (H, H)

    M = B * S
    x2d = hidden_states.reshape(M, H)
    r2d = input_tensor.reshape(M, H)

    # Row tile: big (MXU utilisation), multiple of 8 sublanes, capped by the problem size.
    tm = min(tm, _round_up(M, 8))
    M_pad = _round_up(M, tm)
    if M_pad != M:
        pad = M_pad - M
        x2d = jnp.pad(x2d, ((0, pad), (0, 0)))
        r2d = jnp.pad(r2d, ((0, pad), (0, 0)))

    b2d = bias.reshape(1, H)
    g2d = gamma.reshape(1, H)
    bt2d = beta.reshape(1, H)

    grid = (M_pad // tm,)

    # VMEM budget: double-buffered x/res/out row tiles + resident weight slab + headroom.
    itemsize = jnp.dtype(hidden_states.dtype).itemsize
    est = (2 * 2 * tm * H * itemsize      # x + residual (double-buffered)
           + 2 * tm * H * itemsize        # output (double-buffered)
           + 2 * H * H * itemsize         # weight slab (constant index -> resident)
           + 6 * H * itemsize             # bias / gamma / beta
           + 2 * tm * H * 4)              # f32 intermediates headroom
    vmem_limit = int(min(max(2 * est, 32 << 20), 64 << 20))  # cap for v7x's 64 MiB VMEM

    out2d = pl.pallas_call(
        functools.partial(_self_output_kernel, eps=eps),
        out_shape=jax.ShapeDtypeStruct((M_pad, H), hidden_states.dtype),
        grid_spec=pltpu.PrefetchScalarGridSpec(
            num_scalar_prefetch=0,
            grid=grid,
            in_specs=[
                pl.BlockSpec((tm, H), lambda i: (i, 0)),   # activation rows
                pl.BlockSpec((H, H), lambda i: (0, 0)),    # full weight slab (resident)
                pl.BlockSpec((1, H), lambda i: (0, 0)),    # dense bias
                pl.BlockSpec((tm, H), lambda i: (i, 0)),   # residual rows (input_tensor)
                pl.BlockSpec((1, H), lambda i: (0, 0)),    # LayerNorm gamma
                pl.BlockSpec((1, H), lambda i: (0, 0)),    # LayerNorm beta
            ],
            out_specs=pl.BlockSpec((tm, H), lambda i: (i, 0)),
        ),
        compiler_params=pltpu.CompilerParams(
            dimension_semantics=("parallel",),
            vmem_limit_bytes=vmem_limit,
        ),
    )(x2d, weight_t, b2d, r2d, g2d, bt2d)

    return out2d[:M].reshape(B, S, H)


if __name__ == "__main__":
    # Small config consistent with the module: hidden_size=32, batch=2, seq=8.
    B, S, H = 2, 8, 32
    eps = 1e-12

    key = jax.random.PRNGKey(0)
    kx, kr, kw, kb, kg, kbe = jax.random.split(key, 6)

    hidden_states = jax.random.normal(kx, (B, S, H), dtype=jnp.float32)
    input_tensor = jax.random.normal(kr, (B, S, H), dtype=jnp.float32)
    # Deterministic synthetic parameters (torch Linear weight is [out, in]).
    weight = jax.random.normal(kw, (H, H), dtype=jnp.float32) * 0.02
    bias = jax.random.normal(kb, (H,), dtype=jnp.float32) * 0.02
    gamma = 1.0 + 0.1 * jax.random.normal(kg, (H,), dtype=jnp.float32)
    beta = 0.1 * jax.random.normal(kbe, (H,), dtype=jnp.float32)
    weight_t = weight.T  # [H, H] so kernel computes x @ W^T

    out = roberta_self_output(hidden_states, input_tensor, weight_t, bias, gamma, beta, eps=eps)
    out = jax.block_until_ready(out)

    # Plain-JAX reference: dense -> dropout(eval)=identity -> +residual -> LayerNorm.
    y = hidden_states @ weight_t + bias
    z = y + input_tensor
    mean = z.mean(-1, keepdims=True)
    var = ((z - mean) ** 2).mean(-1, keepdims=True)
    ref = (z - mean) / jnp.sqrt(var + eps) * gamma + beta

    assert out.shape == (B, S, H)
    assert jnp.allclose(out, ref, atol=1e-5, rtol=1e-5)
    print("KERNEL_OK")
</pallas_src>

<mosaic_0001>
module attributes {stable_mosaic.version = 11 : i64} {
  func.func @_self_output_kernel(%arg0: i32, %arg1: memref<16x32xf32, #tpu.memory_space<vmem>>, %arg2: memref<32x32xf32, #tpu.memory_space<vmem>>, %arg3: memref<1x32xf32, #tpu.memory_space<vmem>>, %arg4: memref<16x32xf32, #tpu.memory_space<vmem>>, %arg5: memref<1x32xf32, #tpu.memory_space<vmem>>, %arg6: memref<1x32xf32, #tpu.memory_space<vmem>>, %arg7: memref<16x32xf32, #tpu.memory_space<vmem>>) attributes {dimension_semantics = [#tpu.dimension_semantics<parallel>], iteration_bounds = array<i64: 1>, scalar_prefetch = 0 : i64, scratch_operands = 0 : i64, tpu.core_type = #tpu.core_type<tc>, window_params = [{transform_indices = @transform_0, window_bounds = array<i64: 16, 32>}, {pipeline_mode = #tpu.pipeline_mode<synchronous>, transform_indices = @transform_1, window_bounds = array<i64: 32, 32>}, {pipeline_mode = #tpu.pipeline_mode<synchronous>, transform_indices = @transform_2, window_bounds = array<i64: 1, 32>}, {transform_indices = @transform_3, window_bounds = array<i64: 16, 32>}, {pipeline_mode = #tpu.pipeline_mode<synchronous>, transform_indices = @transform_4, window_bounds = array<i64: 1, 32>}, {pipeline_mode = #tpu.pipeline_mode<synchronous>, transform_indices = @transform_5, window_bounds = array<i64: 1, 32>}, {transform_indices = @transform_6, window_bounds = array<i64: 16, 32>}]} {
    %c0 = arith.constant 0 : index
    %c0_0 = arith.constant 0 : index
    %0 = vector.load %arg1[%c0, %c0_0] : memref<16x32xf32, #tpu.memory_space<vmem>>, vector<16x32xf32>
    %c0_1 = arith.constant 0 : index
    %c0_2 = arith.constant 0 : index
    %1 = vector.load %arg2[%c0_1, %c0_2] : memref<32x32xf32, #tpu.memory_space<vmem>>, vector<32x32xf32>
    %cst = arith.constant dense<0.000000e+00> : vector<16x32xf32>
    %2 = tpu.matmul %0, %1, %cst {dimension_numbers = #tpu.dot_dimension_numbers<[1], [0], [0], [1], [0, 0, 1, 1], [], []>} : vector<16x32xf32>, vector<32x32xf32>, vector<16x32xf32> -> vector<16x32xf32>
    %c0_3 = arith.constant 0 : index
    %c0_4 = arith.constant 0 : index
    %3 = vector.load %arg3[%c0_3, %c0_4] : memref<1x32xf32, #tpu.memory_space<vmem>>, vector<1x32xf32>
    %4 = vector.broadcast %3 : vector<1x32xf32> to vector<16x32xf32>
    %5 = arith.addf %2, %4 : vector<16x32xf32>
    %c0_5 = arith.constant 0 : index
    %c0_6 = arith.constant 0 : index
    %6 = vector.load %arg4[%c0_5, %c0_6] : memref<16x32xf32, #tpu.memory_space<vmem>>, vector<16x32xf32>
    %7 = arith.addf %5, %6 : vector<16x32xf32>
    %cst_7 = arith.constant dense<0.000000e+00> : vector<16xf32>
    %8 = vector.multi_reduction <add>, %7, %cst_7 [1] : vector<16x32xf32> to vector<16xf32>
    %9 = vector.shape_cast %8 : vector<16xf32> to vector<16x1xf32>
    %cst_8 = arith.constant 3.200000e+01 : f32
    %10 = vector.broadcast %cst_8 : f32 to vector<16x1xf32>
    %11 = arith.divf %9, %10 : vector<16x1xf32>
    %12 = vector.broadcast %11 : vector<16x1xf32> to vector<16x32xf32>
    %13 = arith.subf %7, %12 : vector<16x32xf32>
    %14 = arith.mulf %13, %13 : vector<16x32xf32>
    %cst_9 = arith.constant dense<0.000000e+00> : vector<16xf32>
    %15 = vector.multi_reduction <add>, %14, %cst_9 [1] : vector<16x32xf32> to vector<16xf32>
    %16 = vector.shape_cast %15 : vector<16xf32> to vector<16x1xf32>
    %cst_10 = arith.constant 3.200000e+01 : f32
    %17 = vector.broadcast %cst_10 : f32 to vector<16x1xf32>
    %18 = arith.divf %16, %17 : vector<16x1xf32>
    %cst_11 = arith.constant 9.99999996E-13 : f32
    %19 = vector.broadcast %cst_11 : f32 to vector<16x1xf32>
    %20 = arith.addf %18, %19 : vector<16x1xf32>
    %21 = math.rsqrt %20 : vector<16x1xf32>
    %22 = vector.broadcast %21 : vector<16x1xf32> to vector<16x32xf32>
    %23 = arith.mulf %13, %22 : vector<16x32xf32>
    %c0_12 = arith.constant 0 : index
    %c0_13 = arith.constant 0 : index
    %24 = vector.load %arg5[%c0_12, %c0_13] : memref<1x32xf32, #tpu.memory_space<vmem>>, vector<1x32xf32>
    %25 = vector.broadcast %24 : vector<1x32xf32> to vector<16x32xf32>
    %26 = arith.mulf %23, %25 : vector<16x32xf32>
    %c0_14 = arith.constant 0 : index
    %c0_15 = arith.constant 0 : index
    %27 = vector.load %arg6[%c0_14, %c0_15] : memref<1x32xf32, #tpu.memory_space<vmem>>, vector<1x32xf32>
    %28 = vector.broadcast %27 : vector<1x32xf32> to vector<16x32xf32>
    %29 = arith.addf %26, %28 : vector<16x32xf32>
    %c0_16 = arith.constant 0 : index
    %c0_17 = arith.constant 0 : index
    %30 = vector.load %arg7[%c0_16, %c0_17] : memref<16x32xf32, #tpu.memory_space<vmem>>, vector<16x32xf32>
    tpu.vector_store %arg7[%c0_16, %c0_17], %29 {strides = array<i32>} : memref<16x32xf32, #tpu.memory_space<vmem>>, vector<16x32xf32>,
    return
  }
  func.func @transform_0(%arg0: i32) -> (i32, i32) {
    %c0_i32 = arith.constant 0 : i32
    %c0_i32_0 = arith.constant 0 : i32
    return %arg0, %c0_i32 : i32, i32
  }
  func.func @transform_1(%arg0: i32) -> (i32, i32) {
    %c0_i32 = arith.constant 0 : i32
    %c0_i32_0 = arith.constant 0 : i32
    %c0_i32_1 = arith.constant 0 : i32
    return %c0_i32, %c0_i32_0 : i32, i32
  }
  func.func @transform_2(%arg0: i32) -> (i32, i32) {
    %c0_i32 = arith.constant 0 : i32
    %c0_i32_0 = arith.constant 0 : i32
    %c0_i32_1 = arith.constant 0 : i32
    return %c0_i32, %c0_i32_0 : i32, i32
  }
  func.func @transform_3(%arg0: i32) -> (i32, i32) {
    %c0_i32 = arith.constant 0 : i32
    %c0_i32_0 = arith.constant 0 : i32
    return %arg0, %c0_i32 : i32, i32
  }
  func.func @transform_4(%arg0: i32) -> (i32, i32) {
    %c0_i32 = arith.constant 0 : i32
    %c0_i32_0 = arith.constant 0 : i32
    %c0_i32_1 = arith.constant 0 : i32
    return %c0_i32, %c0_i32_0 : i32, i32
  }
  func.func @transform_5(%arg0: i32) -> (i32, i32) {
    %c0_i32 = arith.constant 0 : i32
    %c0_i32_0 = arith.constant 0 : i32
    %c0_i32_1 = arith.constant 0 : i32
    return %c0_i32, %c0_i32_0 : i32, i32
  }
  func.func @transform_6(%arg0: i32) -> (i32, i32) {
    %c0_i32 = arith.constant 0 : i32
    %c0_i32_0 = arith.constant 0 : i32
    return %arg0, %c0_i32 : i32, i32
  }
}

</mosaic_0001>

<llo_original>
// kernel: tpu_custom_call.1
$region0: #{tpu_custom_call.1}
  #allocation0 [shape = 'u32[]', space=smem, size = 0x4, offset = 0x4, fixed_abs, tag = 'smem constant byte address 0x4 - core index']
  #allocation1 [shape = 'u32[144,128]{1,0:T(1,128)}', space=vmem, size = 0x12000, scoped, tag = 'internal scratch']
  %s0 = inlined_call_operand.hbm [shape: f32[16,32], index: 0, kind: input, shape index: {}]
  %s1 = inlined_call_operand.hbm [shape: f32[32,32], index: 1, kind: input, shape index: {}]
  %s2 = inlined_call_operand.vmem [shape: f32[1,32], index: 2, kind: input, shape index: {}]
  %s3 = inlined_call_operand.hbm [shape: f32[16,32], index: 3, kind: input, shape index: {}]
  %s4 = inlined_call_operand.vmem [shape: f32[1,32], index: 4, kind: input, shape index: {}]
  %s5 = inlined_call_operand.vmem [shape: f32[1,32], index: 5, kind: input, shape index: {}]
  %s6 = inlined_call_operand.hbm [shape: f32[16,32], index: 6, kind: output, shape index: {}]
  %s7 = sld [smem:[#allocation0]]
  $region46: #{tpu_custom_call.1} parent=0
    _
  %s9 = ssub.s32 1, %s7
  %s10 = scalar_select 0, %s9, %s7
  $region1: #{tpu_custom_call.1} parent=0
    #allocation2 [shape = 'u8[8192]{0}', space=vmem, size = 0x2000, scoped, tag = 'input window, operand 0, single buffered']
    #allocation3 [shape = 's32[1]{0}', space=sflag, size = 0x4, scoped, tag = 'scoped memory for tpu_custom_call.1']
    #allocation4 [shape = 's32[1]{0}', space=sflag, size = 0x4, scoped, tag = 'scoped memory for tpu_custom_call.1']
    #allocation5 [shape = 'u8[16384]{0}', space=vmem, size = 0x4000, scoped, tag = 'input window, operand 1, single buffered']
    #allocation6 [shape = 's32[1]{0}', space=sflag, size = 0x4, scoped, tag = 'scoped memory for tpu_custom_call.1']
    #allocation7 [shape = 'u8[8192]{0}', space=vmem, size = 0x2000, scoped, tag = 'input window, operand 3, single buffered']
    #allocation8 [shape = 'u8[8192]{0}', space=vmem, size = 0x2000, scoped, tag = 'output window, operand 0, single buffered']
    %11 = vsyncpa [#allocation3], 0
    %12 = vsyncpa [#allocation6], 0
    %13 = vsyncpa [#allocation4], 0
    // Predicated region
    $region2: #{tpu_custom_call.1} parent=1 // pred_check
      _
    $region3: #{tpu_custom_call.1} parent=1 // pred_check_branch
      %15 = sbr.rel (0) target = $region5
    $region4: #{tpu_custom_call.1} parent=1 // pred_region
      %s17 = ssub.s32 256, 256
      %18 = vsyncadd [#allocation3], %s17
      %s19 = sshll.u32 [#allocation2], 4
      %s20 = int_to_ptr.vmem [resolvable:$true] %s19
      %25 = dma.hbm_to_vmem [thread:$0]  %s0, 256, %s20, [#allocation3], 128, 128, 8
    $region5: #{tpu_custom_call.1} parent=1 // pred_fallthru
      _
    // Predicated region
    $region6: #{tpu_custom_call.1} parent=1 // pred_check
      _
    $region7: #{tpu_custom_call.1} parent=1 // pred_check_branch
      %27 = sbr.rel (0) target = $region9
    $region8: #{tpu_custom_call.1} parent=1 // pred_region
      %s29 = ssub.s32 512, 512
      %30 = vsyncadd [#allocation6], %s29
      %s31 = sshll.u32 [#allocation5], 4
      %s32 = int_to_ptr.vmem [resolvable:$true] %s31
      %37 = dma.hbm_to_vmem [thread:$0]  %s1, 512, %s32, [#allocation6], 128, 128, 8
    $region9: #{tpu_custom_call.1} parent=1 // pred_fallthru
      _
    // Predicated region
    $region10: #{tpu_custom_call.1} parent=1 // pred_check
      _
    $region11: #{tpu_custom_call.1} parent=1 // pred_check_branch
      %39 = sbr.rel (0) target = $region13
    $region12: #{tpu_custom_call.1} parent=1 // pred_region
      _
    $region13: #{tpu_custom_call.1} parent=1 // pred_fallthru
      _
    // Predicated region
    $region14: #{tpu_custom_call.1} parent=1 // pred_check
      _
    $region15: #{tpu_custom_call.1} parent=1 // pred_check_branch
      %41 = sbr.rel (0) target = $region17
    $region16: #{tpu_custom_call.1} parent=1 // pred_region
      %s43 = ssub.s32 256, 256
      %44 = vsyncadd [#allocation6], %s43
      %s45 = sshll.u32 [#allocation7], 4
      %s46 = int_to_ptr.vmem [resolvable:$true] %s45
      %51 = dma.hbm_to_vmem [thread:$0]  %s3, 256, %s46, [#allocation6], 128, 128, 8
    $region17: #{tpu_custom_call.1} parent=1 // pred_fallthru
      _
    // Predicated region
    $region18: #{tpu_custom_call.1} parent=1 // pred_check
      _
    $region19: #{tpu_custom_call.1} parent=1 // pred_check_branch
      %53 = sbr.rel (0) target = $region21
    $region20: #{tpu_custom_call.1} parent=1 // pred_region
      _
    $region21: #{tpu_custom_call.1} parent=1 // pred_fallthru
      _
    // Predicated region
    $region22: #{tpu_custom_call.1} parent=1 // pred_check
      _
    $region23: #{tpu_custom_call.1} parent=1 // pred_check_branch
      %55 = sbr.rel (0) target = $region25
    $region24: #{tpu_custom_call.1} parent=1 // pred_region
      _
    $region25: #{tpu_custom_call.1} parent=1 // pred_fallthru
      _
    // Predicated region
    $region26: #{tpu_custom_call.1} parent=1 // pred_check
      _
    $region27: #{tpu_custom_call.1} parent=1 // pred_check_branch
      %57 = sbr.rel (0) target = $region29
    $region28: #{tpu_custom_call.1} parent=1 // pred_region
      %58 = dma.done [#allocation3], 256
    $region29: #{tpu_custom_call.1} parent=1 // pred_fallthru
      _
    // Predicated region
    $region30: #{tpu_custom_call.1} parent=1 // pred_check
      _
    $region31: #{tpu_custom_call.1} parent=1 // pred_check_branch
      %60 = sbr.rel (0) target = $region33
    $region32: #{tpu_custom_call.1} parent=1 // pred_region
      %61 = dma.done [#allocation6], 512
    $region33: #{tpu_custom_call.1} parent=1 // pred_fallthru
      _
    // Predicated region
    $region34: #{tpu_custom_call.1} parent=1 // pred_check
      _
    $region35: #{tpu_custom_call.1} parent=1 // pred_check_branch
      %63 = sbr.rel (0) target = $region37
    $region36: #{tpu_custom_call.1} parent=1 // pred_region
      %64 = dma.done [#allocation6], 256
    $region37: #{tpu_custom_call.1} parent=1 // pred_fallthru
      _
    %v65 = vld [vmem:[#allocation2] sm:$0xff]
    %v66 = vld [vmem:[#allocation2 + $0x8] sm:$0xff]
    %v67 = vld [vmem:[#allocation5] sm:$0xff]
    %v68 = vld [vmem:[#allocation5 + $0x8] sm:$0xff]
    %v69 = vld [vmem:[#allocation5 + $0x10] sm:$0xff]
    %v70 = vld [vmem:[#allocation5 + $0x18] sm:$0xff]
    %v71 = vld [vmem:[%s2] sm:$0x1]
    %v73 = vlaneseq
    %v74 = vshrl.u32 %v73, 7
    %v75 = vsub.s32 0, %v74
    %v76 = vrot.slane %v71, %v75
    %vm78 = vcmask 261120
    %v80 = vsel %vm78, %v65, 0
    %v83 = vsel %vm78, %v66, 0
    %85 = vmatprep.subr.mxu0 0.0
    %86 = vmatpush1.msra.mxu0 %v67
    %87 = vmatprep.subr.mxu0 0.0
    %88 = vmatpush1.msra.mxu0 %v68
    %89 = vmatprep.subr.mxu0 0.0
    %90 = vmatpush1.msra.mxu0 %v69
    %91 = vmatprep.subr.mxu0 0.0
    %92 = vmatpush1.msra.mxu0 %v70
    %93 = vmatprep.subr.mxu0 0.0
    %94 = vmatpush1.msra.mxu0 0.0
    %95 = vmatprep.subr.mxu0 0.0
    %96 = vmatpush1.msra.mxu0 0.0
    %97 = vmatprep.subr.mxu0 0.0
    %98 = vmatpush1.msra.mxu0 0.0
    %99 = vmatprep.subr.mxu0 0.0
    %100 = vmatpush1.msra.mxu0 0.0
    %101 = vmatprep.subr.mxu0 0.0
    %102 = vmatpush1.msra.mxu0 0.0
    %103 = vmatprep.subr.mxu0 0.0
    %104 = vmatpush1.msra.mxu0 0.0
    %105 = vmatprep.subr.mxu0 0.0
    %106 = vmatpush1.msra.mxu0 0.0
    %107 = vmatprep.subr.mxu0 0.0
    %108 = vmatpush1.msra.mxu0 0.0
    %109 = vmatprep.subr.mxu0 0.0
    %110 = vmatpush1.msra.mxu0 0.0
    %111 = vmatprep.subr.mxu0 0.0
    %112 = vmatpush1.msra.mxu0 0.0
    %113 = vmatprep.subr.mxu0 0.0
    %114 = vmatpush1.msra.mxu0 0.0
    %115 = vmatprep.subr.mxu0 0.0
    %116 = vmatpush1.msra.mxu0 0.0
    %117 = vmatprep.subr.mxu0 0.0
    %118 = vmatpush1.msra.mxu0 0.0
    %119 = vmatprep.subr.mxu0 0.0
    %120 = vmatpush1.msra.mxu0 0.0
    %121 = vmatprep.subr.mxu0 0.0
    %122 = vmatpush1.msra.mxu0 0.0
    %123 = vmatprep.subr.mxu0 0.0
    %124 = vmatpush1.msra.mxu0 0.0
    %125 = vmatprep.subr.mxu0 0.0
    %126 = vmatpush1.msra.mxu0 0.0
    %127 = vmatprep.subr.mxu0 0.0
    %128 = vmatpush1.msra.mxu0 0.0
    %129 = vmatprep.subr.mxu0 0.0
    %130 = vmatpush1.msra.mxu0 0.0
    %131 = vmatprep.subr.mxu0 0.0
    %132 = vmatpush1.msra.mxu0 0.0
    %133 = vmatprep.subr.mxu0 0.0
    %134 = vmatpush1.msra.mxu0 0.0
    %135 = vmatprep.subr.mxu0 0.0
    %136 = vmatpush1.msra.mxu0 0.0
    %137 = vmatprep.subr.mxu0 0.0
    %138 = vmatpush1.msra.mxu0 0.0
    %139 = vmatprep.subr.mxu0 0.0
    %140 = vmatpush1.msra.mxu0 0.0
    %141 = vmatprep.subr.mxu0 0.0
    %142 = vmatpush1.msra.mxu0 0.0
    %143 = vmatprep.subr.mxu0 0.0
    %144 = vmatpush1.msra.mxu0 0.0
    %145 = vmatprep.subr.mxu0 0.0
    %146 = vmatpush1.msra.mxu0 0.0
    %147 = vmatprep.subr.mxu0 0.0
    %148 = vmatpush1.msra.mxu0 0.0
    %149 = vmatprep.mubr.f32.mxu0 0.0
    %150 = vmatmul.mubr.f32.gmra.mrb[0].mxu0 %v80
    %v151 = vpop.f32.mrb[0].mxu0
    %v152 = vadd.f32 %v76, %v151
    %v153 = vpop.f32.mrb[0].mxu0
    %154 = vmatprep.mubr.f32.mxu0 0.0
    %155 = vmatmul.mubr.f32.gmra.mrb[0].mxu0 %v83
    %v156 = vpop.f32.mrb[0].mxu0
    %v157 = vadd.f32 %v76, %v156
    %v158 = vpop.f32.mrb[0].mxu0
    %159 = vdwg.mxu0
    %v160 = vld [vmem:[#allocation7] sm:$0xff]
    %v161 = vld [vmem:[#allocation7 + $0x8] sm:$0xff]
    %v162 = vadd.f32 %v152, %v160
    %v163 = vadd.f32 %v157, %v161
    %v164 = vsel %vm78, %v162, 0.0
    %165 = vadd.xlane.f32.xlu0 %v164
    %v166 = vpop.xlane.xlu0 %165
    %v167 = vsel %vm78, %v163, 0.0
    %168 = vadd.xlane.f32.xlu0 %v167
    %v169 = vpop.xlane.xlu0 %168
    %v170 = vrcp.pop 32.0
    %v171 = vmul.f32 %v166, %v170
    %v172 = vmul.f32 %v169, %v170
    %v173 = vsub.f32 %v162, %v171
    %v174 = vsub.f32 %v163, %v172
    %v175 = vmul.f32 %v173, %v173
    %v176 = vmul.f32 %v174, %v174
    %v177 = vsel %vm78, %v175, 0.0
    %178 = vadd.xlane.f32.xlu0 %v177
    %v179 = vpop.xlane.xlu0 %178
    %v180 = vsel %vm78, %v176, 0.0
    %181 = vadd.xlane.f32.xlu0 %v180
    %v182 = vpop.xlane.xlu0 %181
    %v183 = vmul.f32 %v179, %v170
    %v184 = vmul.f32 %v182, %v170
    %v185 = vadd.f32 %v183, 1e-12
    %v186 = vadd.f32 %v184, 1e-12
    %v187 = vrsqrt.pop %v185
    %v188 = vrsqrt.pop %v186
    %v189 = vmul.f32 %v173, %v187
    %v190 = vmul.f32 %v174, %v188
    %v191 = vld [vmem:[%s4] sm:$0x1]
    %v193 = vlaneseq
    %v194 = vshrl.u32 %v193, 7
    %v195 = vsub.s32 0, %v194
    %v196 = vrot.slane %v191, %v195
    %v198 = vmul.f32 %v189, %v196
    %v199 = vmul.f32 %v190, %v196
    %v200 = vld [vmem:[%s5] sm:$0x1]
    %v202 = vlaneseq
    %v203 = vshrl.u32 %v202, 7
    %v204 = vsub.s32 0, %v203
    %v205 = vrot.slane %v200, %v204
    %v207 = vadd.f32 %v198, %v205
    %v208 = vadd.f32 %v199, %v205
    %209 = vst.msk [vmem:[#allocation8] sm:$0xff] %vm78, %v207
    %210 = vst.msk [vmem:[#allocation8 + $0x8] sm:$0xff] %vm78, %v208
    // Predicated region
    $region38: #{tpu_custom_call.1} parent=1 // pred_check
      _
    $region39: #{tpu_custom_call.1} parent=1 // pred_check_branch
      %212 = sbr.rel (0) target = $region41
    $region40: #{tpu_custom_call.1} parent=1 // pred_region
      %s214 = ssub.s32 256, 256
      %215 = vsyncadd [#allocation4], %s214
      %s216 = sshll.u32 [#allocation8], 4
      %s217 = int_to_ptr.vmem [resolvable:$true] %s216
      %222 = dma.vmem_to_hbm [thread:$0]  %s217, 256, %s6, [#allocation4], 128, 128, 8
    $region41: #{tpu_custom_call.1} parent=1 // pred_fallthru
      _
    // Predicated region
    $region42: #{tpu_custom_call.1} parent=1 // pred_check
      _
    $region43: #{tpu_custom_call.1} parent=1 // pred_check_branch
      %224 = sbr.rel (0) target = $region45
    $region44: #{tpu_custom_call.1} parent=1 // pred_region
      %225 = dma.done [#allocation4], 256
    $region45: #{tpu_custom_call.1} parent=1 // pred_fallthru
      _
    %226 = vsyncpa [#allocation3], 1
    %227 = vsyncpa [#allocation6], 1
    %228 = vsyncpa [#allocation4], 1

</llo_original>
